<compile_context>
chip_gen: v7x
topology: tpu7x:2x2x1
jax: 0.10.0
libtpu: 0.0.40
codegen_flags: <defaults>
</compile_context>

<pallas_src>
import functools

import jax
import jax.numpy as jnp
from jax.experimental import pallas as pl
from jax.experimental.pallas import tpu as pltpu


def _round_up(x, m):
    return ((x + m - 1) // m) * m


# ----------------------------------------------------------------------------
# Fused kernel: chain of 1x1 grouped convs, sigmoid between layers, abs at end
# ----------------------------------------------------------------------------
def _fused_mlp_kernel(*refs, n_layers, first_mode, groups0, h0):
    """refs = (x_ref, w_0..w_{L-1}, b_0..b_{L-1}, o_ref)

      x_ref : (Cin_total, Lt)            channel-major, spatial(lane)-last
      w_0   : (Cout0, 1) per-channel scale  when first_mode in {scale,
              scale_grouped}, else (Cout0, Cin0) transposed block-diagonal
      w_i>0 : (Cout_i, Cin_i) transposed block-diagonal
      b_i   : (Cout_i, 1)
      o_ref : (Cout_total, Lt)
    """
    x_ref = refs[0]
    w_refs = refs[1:1 + n_layers]
    b_refs = refs[1 + n_layers:1 + 2 * n_layers]
    o_ref = refs[1 + 2 * n_layers]

    def sigmoid(z):
        # Exact sigmoid via tanh: stays on the EUP slot (no VALU divide).
        return 0.5 * jnp.tanh(0.5 * z) + 0.5

    x = x_ref[...]                                   # (Cin, Lt)
    w0 = w_refs[0][...]
    b0 = b_refs[0][...]
    lt = x.shape[-1]

    if first_mode == "scale":
        # groups == 1, cin == 1: (H0,1)*(1,Lt)+(H0,1) pure VPU broadcast.
        act = w0 * x + b0
    elif first_mode == "scale_grouped":
        # groups > 1, cin-per-group == 1: replicate each group's input row h0
        # times (sublane broadcast + concat), then a single VPU multiply-add.
        parts = [jnp.broadcast_to(x[g:g + 1, :], (h0, lt))
                 for g in range(groups0)]
        x_exp = jnp.concatenate(parts, axis=0)       # (G*h0, Lt), group-major
        act = w0 * x_exp + b0
    else:
        act = jnp.dot(w0, x, preferred_element_type=jnp.float32) + b0

    if n_layers > 1:
        act = sigmoid(act)
        for i in range(1, n_layers - 1):
            act = sigmoid(jnp.dot(w_refs[i][...], act,
                                  preferred_element_type=jnp.float32)
                          + b_refs[i][...])
        act = jnp.dot(w_refs[n_layers - 1][...], act,
                      preferred_element_type=jnp.float32)
        act = act + b_refs[n_layers - 1][...]

    o_ref[...] = jnp.abs(act).astype(o_ref.dtype)


# ----------------------------------------------------------------------------
# Tile selection + pallas_call wrapper
# ----------------------------------------------------------------------------
def _choose_l_tile(L, B, cin, cout, h_max, weight_bytes, l_tile_req):
    """Pick the lane (L) tile: 128-aligned, VMEM-budgeted, balanced, and with
    at least 2 parallel grid tiles so both v7x TensorCores get work."""
    if L <= 128:
        return L                        # one full-width tile, no padding
    # VMEM budget: double-buffered (Cin+Cout) I/O columns + ~3 live activation
    # temporaries per column + (double-buffered) resident weights.  Kept below
    # the smallest default scoped-VMEM limit so no vmem_limit override needed.
    budget = 12 * 1024 * 1024
    bytes_per_col = 4 * (2 * (cin + cout) + 3 * h_max)
    avail = max(budget - 2 * weight_bytes, 128 * bytes_per_col)
    lt_cap = max(128, (avail // bytes_per_col) // 128 * 128)
    lt = min(l_tile_req, lt_cap, _round_up(L, 128))
    lt = max(lt, 128)
    n_tiles = pl.cdiv(L, lt)
    if B * n_tiles < 2:                 # give both v7x TensorCores work
        n_tiles = 2
    # Balance tiles so the last one is not mostly padding.
    return _round_up(pl.cdiv(L, n_tiles), 128)


def fused_grouped_mlp(x, weights, biases, first_mode, groups0, h0, *,
                      l_tile=4096):
    """x: (B, Cin, L) in PyTorch NCL layout.  Returns (B, Cout, L)."""
    B, cin, L = x.shape
    n_layers = len(weights)
    cout = biases[-1].shape[0]
    h_max = max(b.shape[0] for b in biases)
    weight_bytes = 4 * (sum(w.size for w in weights)
                        + sum(b.size for b in biases))

    lt = _choose_l_tile(L, B, cin, cout, h_max, weight_bytes, l_tile)
    n_l = pl.cdiv(L, lt)

    kernel = functools.partial(_fused_mlp_kernel, n_layers=n_layers,
                               first_mode=first_mode, groups0=groups0, h0=h0)

    # Grid directly over (batch, L tiles) on the NCL layout; the batch dim is
    # squeezed so the kernel sees channel-major, lane-dense (C, Lt) tiles.
    # Partial last lane tiles are clamped by Pallas on load/store.
    in_specs = [pl.BlockSpec((pl.Squeezed(), cin, lt), lambda b, m: (b, 0, m))]
    # Weights / biases: constant index_map -> DMA'd once, VMEM-resident.
    for w in weights:
        in_specs.append(pl.BlockSpec(w.shape, lambda b, m: (0, 0)))
    for bb in biases:
        in_specs.append(pl.BlockSpec(bb.shape, lambda b, m: (0, 0)))

    return pl.pallas_call(
        kernel,
        out_shape=jax.ShapeDtypeStruct((B, cout, L), x.dtype),
        grid=(B, n_l),
        in_specs=in_specs,
        out_specs=pl.BlockSpec((pl.Squeezed(), cout, lt),
                               lambda b, m: (b, 0, m)),
        compiler_params=pltpu.CompilerParams(
            dimension_semantics=("parallel", "parallel")),
    )(x, *weights, *biases)


# ----------------------------------------------------------------------------
# Parameter init (PyTorch Conv1d-style uniform) + packing
# ----------------------------------------------------------------------------
def _init_layer(key, groups, cin_pg, cout_pg):
    kw, kb = jax.random.split(key)
    bound = 1.0 / float(cin_pg) ** 0.5
    w = jax.random.uniform(kw, (groups, cout_pg, cin_pg), jnp.float32,
                           -bound, bound)
    b = jax.random.uniform(kb, (groups, cout_pg), jnp.float32, -bound, bound)
    return w, b


def _pack_block_diag(w):
    """(G, cout_pg, cin_pg) -> transposed block-diagonal (G*cout_pg, G*cin_pg)."""
    g, cout_pg, cin_pg = w.shape
    wt = jnp.zeros((g * cout_pg, g * cin_pg), jnp.float32)
    for i in range(g):
        wt = wt.at[i * cout_pg:(i + 1) * cout_pg,
                   i * cin_pg:(i + 1) * cin_pg].set(w[i])
    return wt


class Model2Pallas:
    """JAX/Pallas equivalent of PyTorch model_2 (forward pass only)."""

    def __init__(self, n_layers, n_neurons, n_TACs, key, l_tile=4096):
        self.n_layers = n_layers
        self.n_neurons = n_neurons
        self.n_TACs = n_TACs
        self.l_tile = l_tile

        keys = jax.random.split(key, 2 * n_layers)
        raw = {"trunk": [], "branch": []}
        for i in range(n_layers):
            if i == 0:
                t_dims, b_dims = (1, n_neurons), (1, n_neurons)
            elif i == n_layers - 1:
                t_dims, b_dims = (n_neurons, 1), (n_neurons, 3)
            else:
                t_dims, b_dims = (n_neurons, n_neurons), (n_neurons, n_neurons)
            raw["trunk"].append(_init_layer(keys[2 * i], 1, *t_dims))
            raw["branch"].append(_init_layer(keys[2 * i + 1], n_TACs, *b_dims))
        self.raw = raw
        self.packed = {k: self._pack_path(v) for k, v in raw.items()}

    @staticmethod
    def _pack_path(raw_layers):
        g0, h0, cin0_pg = raw_layers[0][0].shape   # (G, cout_pg, cin_pg)
        weights, biases = [], []
        if cin0_pg == 1 and (g0 == 1 or h0 % 8 == 0):
            # First-layer VPU fast path: per-output-channel scale vector.
            first_mode = "scale" if g0 == 1 else "scale_grouped"
            weights.append(raw_layers[0][0].reshape(g0 * h0, 1))
        else:
            first_mode = "matmul"
            weights.append(_pack_block_diag(raw_layers[0][0]))
        biases.append(raw_layers[0][1].reshape(-1, 1))
        for w, b in raw_layers[1:]:
            weights.append(_pack_block_diag(w))
            biases.append(b.reshape(-1, 1))
        return dict(weights=weights, biases=biases, first_mode=first_mode,
                    groups0=g0, h0=h0)

    def __call__(self, x, which, l_tile=None):
        # x: PyTorch NCL layout (B, C, L); output (B, Cout, L).
        p = self.packed[which]
        return fused_grouped_mlp(
            x, p["weights"], p["biases"], p["first_mode"], p["groups0"],
            p["h0"], l_tile=self.l_tile if l_tile is None else l_tile)

    def reference(self, x, which):
        """Pure-JAX reference (per-group einsum) for verification."""
        raw = self.raw[which]
        G = raw[0][0].shape[0]
        B, C, L = x.shape
        cin0 = C // G
        xg = x.reshape(B, G, cin0, L).transpose(1, 0, 3, 2).reshape(G, B * L, cin0)
        n = len(raw)
        for i, (w, b) in enumerate(raw):       # w: (G,cout,cin), b: (G,cout)
            y = jnp.einsum("gmc,goc->gmo", xg, w) + b[:, None, :]
            xg = jnp.abs(y) if i == n - 1 else jax.nn.sigmoid(y)
        cout = xg.shape[2]
        return (xg.reshape(G, B, L, cout).transpose(1, 0, 3, 2)
                .reshape(B, G * cout, L))


if __name__ == "__main__":
    n_layers, n_neurons, n_TACs = 3, 32, 4
    B, L = 2, 16

    root = jax.random.PRNGKey(0)
    k_model, k_trunk, k_branch, k_big = jax.random.split(root, 4)

    model = Model2Pallas(n_layers, n_neurons, n_TACs, k_model)

    x_trunk = jax.random.normal(k_trunk, (B, 1, L), jnp.float32)
    x_branch = jax.random.normal(k_branch, (B, n_TACs, L), jnp.float32)

    out_trunk = jax.block_until_ready(model(x_trunk, "trunk"))
    out_branch = jax.block_until_ready(model(x_branch, "branch"))
    assert out_trunk.shape == (B, 1, L)
    assert out_branch.shape == (B, 3 * n_TACs, L)
    assert jnp.allclose(out_trunk, model.reference(x_trunk, "trunk"),
                        atol=1e-4, rtol=1e-4)
    assert jnp.allclose(out_branch, model.reference(x_branch, "branch"),
                        atol=1e-4, rtol=1e-4)

    # Larger spatial size: exercises the clamped partial last lane tile.
    L_big = 1000
    x_big = jax.random.normal(k_big, (B, n_TACs, L_big), jnp.float32)
    out_big = jax.block_until_ready(model(x_big, "branch"))
    assert out_big.shape == (B, 3 * n_TACs, L_big)
    assert jnp.allclose(out_big, model.reference(x_big, "branch"),
                        atol=1e-4, rtol=1e-4)

    # Same input with a small forced tile: exercises multiple L tiles per
    # batch (512-wide tiles -> full + partial tile); result must match.
    out_tiled = jax.block_until_ready(model(x_big, "branch", l_tile=512))
    assert jnp.allclose(out_tiled, out_big, atol=1e-5, rtol=1e-5)

    # Trunk path on the larger input as well.
    x_big_t = x_big[:, :1, :]
    out_big_t = jax.block_until_ready(model(x_big_t, "trunk"))
    assert jnp.allclose(out_big_t, model.reference(x_big_t, "trunk"),
                        atol=1e-4, rtol=1e-4)

    print("KERNEL_OK")
</pallas_src>

<mosaic_0001>
module attributes {stable_mosaic.version = 11 : i64} {
  func.func @_fused_mlp_kernel(%arg0: i32, %arg1: i32, %arg2: memref<1x1x16xf32, #tpu.memory_space<vmem>>, %arg3: memref<32x1xf32, #tpu.memory_space<vmem>>, %arg4: memref<32x32xf32, #tpu.memory_space<vmem>>, %arg5: memref<1x32xf32, #tpu.memory_space<vmem>>, %arg6: memref<32x1xf32, #tpu.memory_space<vmem>>, %arg7: memref<32x1xf32, #tpu.memory_space<vmem>>, %arg8: memref<1x1xf32, #tpu.memory_space<vmem>>, %arg9: memref<1x1x16xf32, #tpu.memory_space<vmem>>) attributes {dimension_semantics = [#tpu.dimension_semantics<parallel>, #tpu.dimension_semantics<parallel>], iteration_bounds = array<i64: 2, 1>, scalar_prefetch = 0 : i64, scratch_operands = 0 : i64, tpu.core_type = #tpu.core_type<tc>, window_params = [{transform_indices = @transform_0, window_bounds = array<i64: 1, 1, 16>}, {pipeline_mode = #tpu.pipeline_mode<synchronous>, transform_indices = @transform_1, window_bounds = array<i64: 32, 1>}, {pipeline_mode = #tpu.pipeline_mode<synchronous>, transform_indices = @transform_2, window_bounds = array<i64: 32, 32>}, {pipeline_mode = #tpu.pipeline_mode<synchronous>, transform_indices = @transform_3, window_bounds = array<i64: 1, 32>}, {pipeline_mode = #tpu.pipeline_mode<synchronous>, transform_indices = @transform_4, window_bounds = array<i64: 32, 1>}, {pipeline_mode = #tpu.pipeline_mode<synchronous>, transform_indices = @transform_5, window_bounds = array<i64: 32, 1>}, {pipeline_mode = #tpu.pipeline_mode<synchronous>, transform_indices = @transform_6, window_bounds = array<i64: 1, 1>}, {transform_indices = @transform_7, window_bounds = array<i64: 1, 1, 16>}]} {
    %c0 = arith.constant 0 : index
    %c0_0 = arith.constant 0 : index
    %c0_1 = arith.constant 0 : index
    %0 = vector.load %arg2[%c0, %c0_0, %c0_1] : memref<1x1x16xf32, #tpu.memory_space<vmem>>, vector<1x1x16xf32>
    %1 = vector.shape_cast %0 : vector<1x1x16xf32> to vector<1x16xf32>
    %c0_2 = arith.constant 0 : index
    %c0_3 = arith.constant 0 : index
    %2 = vector.load %arg3[%c0_2, %c0_3] : memref<32x1xf32, #tpu.memory_space<vmem>>, vector<32x1xf32>
    %c0_4 = arith.constant 0 : index
    %c0_5 = arith.constant 0 : index
    %3 = vector.load %arg6[%c0_4, %c0_5] : memref<32x1xf32, #tpu.memory_space<vmem>>, vector<32x1xf32>
    %4 = vector.broadcast %2 : vector<32x1xf32> to vector<32x16xf32>
    %5 = vector.broadcast %1 : vector<1x16xf32> to vector<32x16xf32>
    %6 = arith.mulf %4, %5 : vector<32x16xf32>
    %7 = vector.broadcast %3 : vector<32x1xf32> to vector<32x16xf32>
    %8 = arith.addf %6, %7 : vector<32x16xf32>
    %cst = arith.constant 5.000000e-01 : f32
    %9 = vector.broadcast %cst : f32 to vector<32x16xf32>
    %10 = arith.mulf %9, %8 : vector<32x16xf32>
    %11 = math.tanh %10 : vector<32x16xf32>
    %cst_6 = arith.constant 5.000000e-01 : f32
    %12 = vector.broadcast %cst_6 : f32 to vector<32x16xf32>
    %13 = arith.mulf %12, %11 : vector<32x16xf32>
    %cst_7 = arith.constant 5.000000e-01 : f32
    %14 = vector.broadcast %cst_7 : f32 to vector<32x16xf32>
    %15 = arith.addf %13, %14 : vector<32x16xf32>
    %c0_8 = arith.constant 0 : index
    %c0_9 = arith.constant 0 : index
    %16 = vector.load %arg4[%c0_8, %c0_9] : memref<32x32xf32, #tpu.memory_space<vmem>>, vector<32x32xf32>
    %cst_10 = arith.constant dense<0.000000e+00> : vector<32x16xf32>
    %17 = tpu.matmul %16, %15, %cst_10 {dimension_numbers = #tpu.dot_dimension_numbers<[1], [0], [0], [1], [0, 0, 1, 1], [], []>} : vector<32x32xf32>, vector<32x16xf32>, vector<32x16xf32> -> vector<32x16xf32>
    %c0_11 = arith.constant 0 : index
    %c0_12 = arith.constant 0 : index
    %18 = vector.load %arg7[%c0_11, %c0_12] : memref<32x1xf32, #tpu.memory_space<vmem>>, vector<32x1xf32>
    %19 = vector.broadcast %18 : vector<32x1xf32> to vector<32x16xf32>
    %20 = arith.addf %17, %19 : vector<32x16xf32>
    %cst_13 = arith.constant 5.000000e-01 : f32
    %21 = vector.broadcast %cst_13 : f32 to vector<32x16xf32>
    %22 = arith.mulf %21, %20 : vector<32x16xf32>
    %23 = math.tanh %22 : vector<32x16xf32>
    %cst_14 = arith.constant 5.000000e-01 : f32
    %24 = vector.broadcast %cst_14 : f32 to vector<32x16xf32>
    %25 = arith.mulf %24, %23 : vector<32x16xf32>
    %cst_15 = arith.constant 5.000000e-01 : f32
    %26 = vector.broadcast %cst_15 : f32 to vector<32x16xf32>
    %27 = arith.addf %25, %26 : vector<32x16xf32>
    %c0_16 = arith.constant 0 : index
    %c0_17 = arith.constant 0 : index
    %28 = vector.load %arg5[%c0_16, %c0_17] : memref<1x32xf32, #tpu.memory_space<vmem>>, vector<1x32xf32>
    %cst_18 = arith.constant dense<0.000000e+00> : vector<1x16xf32>
    %29 = tpu.matmul %28, %27, %cst_18 {dimension_numbers = #tpu.dot_dimension_numbers<[1], [0], [0], [1], [0, 0, 1, 1], [], []>} : vector<1x32xf32>, vector<32x16xf32>, vector<1x16xf32> -> vector<1x16xf32>
    %c0_19 = arith.constant 0 : index
    %c0_20 = arith.constant 0 : index
    %30 = vector.load %arg8[%c0_19, %c0_20] : memref<1x1xf32, #tpu.memory_space<vmem>>, vector<1x1xf32>
    %31 = vector.broadcast %30 : vector<1x1xf32> to vector<1x16xf32>
    %32 = arith.addf %29, %31 : vector<1x16xf32>
    %33 = math.absf %32 : vector<1x16xf32>
    %c0_21 = arith.constant 0 : index
    %c0_22 = arith.constant 0 : index
    %c0_23 = arith.constant 0 : index
    %34 = vector.load %arg9[%c0_21, %c0_22, %c0_23] : memref<1x1x16xf32, #tpu.memory_space<vmem>>, vector<1x1x16xf32>
    %35 = vector.shape_cast %34 : vector<1x1x16xf32> to vector<1x16xf32>
    %36 = vector.shape_cast %33 : vector<1x16xf32> to vector<1x1x16xf32>
    tpu.vector_store %arg9[%c0_21, %c0_22, %c0_23], %36 {strides = array<i32>} : memref<1x1x16xf32, #tpu.memory_space<vmem>>, vector<1x1x16xf32>,
    return
  }
  func.func @transform_0(%arg0: i32, %arg1: i32) -> (i32, i32, i32) {
    %c0_i32 = arith.constant 0 : i32
    %c0_i32_0 = arith.constant 0 : i32
    return %arg0, %c0_i32, %arg1 : i32, i32, i32
  }
  func.func @transform_1(%arg0: i32, %arg1: i32) -> (i32, i32) {
    %c0_i32 = arith.constant 0 : i32
    %c0_i32_0 = arith.constant 0 : i32
    %c0_i32_1 = arith.constant 0 : i32
    return %c0_i32, %c0_i32_0 : i32, i32
  }
  func.func @transform_2(%arg0: i32, %arg1: i32) -> (i32, i32) {
    %c0_i32 = arith.constant 0 : i32
    %c0_i32_0 = arith.constant 0 : i32
    %c0_i32_1 = arith.constant 0 : i32
    return %c0_i32, %c0_i32_0 : i32, i32
  }
  func.func @transform_3(%arg0: i32, %arg1: i32) -> (i32, i32) {
    %c0_i32 = arith.constant 0 : i32
    %c0_i32_0 = arith.constant 0 : i32
    %c0_i32_1 = arith.constant 0 : i32
    return %c0_i32, %c0_i32_0 : i32, i32
  }
  func.func @transform_4(%arg0: i32, %arg1: i32) -> (i32, i32) {
    %c0_i32 = arith.constant 0 : i32
    %c0_i32_0 = arith.constant 0 : i32
    %c0_i32_1 = arith.constant 0 : i32
    return %c0_i32, %c0_i32_0 : i32, i32
  }
  func.func @transform_5(%arg0: i32, %arg1: i32) -> (i32, i32) {
    %c0_i32 = arith.constant 0 : i32
    %c0_i32_0 = arith.constant 0 : i32
    %c0_i32_1 = arith.constant 0 : i32
    return %c0_i32, %c0_i32_0 : i32, i32
  }
  func.func @transform_6(%arg0: i32, %arg1: i32) -> (i32, i32) {
    %c0_i32 = arith.constant 0 : i32
    %c0_i32_0 = arith.constant 0 : i32
    %c0_i32_1 = arith.constant 0 : i32
    return %c0_i32, %c0_i32_0 : i32, i32
  }
  func.func @transform_7(%arg0: i32, %arg1: i32) -> (i32, i32, i32) {
    %c0_i32 = arith.constant 0 : i32
    %c0_i32_0 = arith.constant 0 : i32
    return %arg0, %c0_i32, %arg1 : i32, i32, i32
  }
}

</mosaic_0001>

<llo_original>
// kernel: tpu_custom_call.1
$region0: #{tpu_custom_call.1}
  #allocation0 [shape = 'u32[]', space=smem, size = 0x4, offset = 0x4, fixed_abs, tag = 'smem constant byte address 0x4 - core index']
  #allocation1 [shape = 'u32[144,128]{1,0:T(1,128)}', space=vmem, size = 0x12000, scoped, tag = 'internal scratch']
  #allocation2 [shape = 'f32[1,1]{1,0:T(1,128)S(1)}', space=vmem, size = 0x200, scoped, tag = 'scoped memory for tpu_custom_call.1']
  %s0 = inlined_call_operand.vmem [shape: f32[2,1,16], index: 0, kind: input, shape index: {}]
  %s1 = inlined_call_operand.vmem [shape: f32[32,1], index: 1, kind: input, shape index: {}]
  %s2 = inlined_call_operand.vmem [shape: f32[32,32], index: 2, kind: input, shape index: {}]
  %s3 = inlined_call_operand.vmem [shape: f32[1,32], index: 3, kind: input, shape index: {}]
  %s4 = inlined_call_operand.vmem [shape: f32[32,1], index: 4, kind: input, shape index: {}]
  %s5 = inlined_call_operand.vmem [shape: f32[32,1], index: 5, kind: input, shape index: {}]
  %s6 = inlined_call_operand.<no memory space> [shape: f32[1,1], index: 6, kind: input, shape index: {}]
  %s7 = inlined_call_operand.hbm [shape: f32[2,1,16], index: 7, kind: output, shape index: {}]
  %s8 = sld [smem:[#allocation0]]
  $region61: #{tpu_custom_call.1} parent=0
    _
  %s10 = ssub.s32 1, %s8
  %s11 = scalar_select 0, %s10, %s8
  %v12 = vstv %s6
  %13 = vst [vmem:[#allocation2] sm:$0x1] %v12
  $region1: #{tpu_custom_call.1} parent=0
    #allocation3 [shape = 'u8[1024]{0}', space=vmem, size = 0x400, scoped, tag = 'output window, operand 0']
    #allocation4 [shape = 's32[2]{0}', space=sflag, size = 0x8, scoped, tag = 'scoped memory for tpu_custom_call.1']
    %14 = vsyncpa [#allocation4], 0
    %s15 = scalar_lea.sflag [#allocation4], 1
    %16 = vsyncpa %s15, 0
    loop: start=0, step=1, limit=4
    $region2: #{tpu_custom_call.1} parent=1 // loop_pre_header
      _
    $region3: #{tpu_custom_call.1} parent=1 // loop_header
      %s18 = sphi 0, %s22
      %p19 = scmp.ge.s32.totalorder %s18, 4
      %s25 = sphi 0, %s37
      %s26 = sphi 0, %s33
      %s27 = sphi 0, %s25
      %s28 = sphi 0, %s26
      %s29 = sphi 0, %s27
      %s30 = sphi 0, %s28
      %s42 = sphi 0, %s44
      %s45 = sphi 0, %s42
      %s46 = sphi 0, %s45
      %s62 = sphi 0, %s46
      %s66 = sphi 0, %s66
      %s68 = sphi 0, %s66
      %s69 = sphi 0, %s68
      %s83 = sphi 0, %s69
      %s87 = sphi 0, %s87
      %s89 = sphi 0, %s87
      %s90 = sphi 0, %s89
      %s104 = sphi 0, %s90
      %s108 = sphi 0, %s108
      %s110 = sphi 0, %s108
      %s111 = sphi 0, %s110
      %s125 = sphi 0, %s111
      %s129 = sphi 0, %s129
      %s131 = sphi 0, %s129
      %s132 = sphi 0, %s131
      %s146 = sphi 0, %s132
      %s150 = sphi 0, %s150
      %s152 = sphi 0, %s150
      %s153 = sphi 0, %s152
      %s167 = sphi 0, %s153
      %s171 = sphi 0, %s171
      %s173 = sphi 0, %s171
      %s174 = sphi 0, %s173
      %s188 = sphi 0, %s174
      %s196 = sphi 0, %s198
      %s199 = sphi 0, %s196
      %s200 = sphi 0, %s199
      %s216 = sphi 0, %s200
    $region4: #{tpu_custom_call.1} parent=1 // loop_header_branch
      %21 = sbr.rel (%p19) target = $region8
    $region5: #{tpu_custom_call.1} parent=1 // loop_body
      %s23 = ssub.s32 %s18, 1
      %s24 = ssub.s32 %s18, 2
      %s31 = sadd.s32 1, %s26
      %p32 = scmp.ge.s32.totalorder %s31, 1
      %s33 = scalar_select %p32, 0, %s31
      %s34 = sadd.s32 1, %s25
      %s35 = scalar_select %p32, %s34, %s25
      %p36 = scmp.ge.s32.totalorder %s35, 2
      %s37 = scalar_select %p36, 0, %s35
      %s38 = ssub.s32 %s25, %s37
      %s39 = ssub.s32 %s26, %s33
      %s40 = sor.u32 %s38, %s39
      %p41 = scmp.eq.s32.totalorder %s40, 0
      %s43 = sadd.s32 %s42, 1
      %s44 = scalar_select %p41, %s42, %s43
      %p47 = pneg %p41
      %p48 = scmp.eq.s32.totalorder %s18, 1
      %p49 = por %p47, %p48
      %p50 = scmp.ne.s32.totalorder %s42, %s45
      %p51 = scmp.eq.s32.totalorder %s18, 0
      %p52 = por %p50, %p51
      %p53 = scmp.ne.s32.totalorder %s42, %s45
      %p54 = scmp.eq.s32.totalorder %s23, 1
      %p55 = por %p53, %p54
      %p56 = scmp.ne.s32.totalorder %s45, %s46
      %p57 = scmp.eq.s32.totalorder %s23, 0
      %p58 = por %p56, %p57
      %p59 = scmp.ne.s32.totalorder %s45, %s46
      %p60 = scmp.eq.s32.totalorder %s24, 1
      %p61 = por %p59, %p60
      %p63 = scmp.ne.s32.totalorder %s46, %s62
      %p64 = scmp.eq.s32.totalorder %s24, 0
      %p65 = por %p63, %p64
      %s67 = sadd.s32 %s66, 1
      %p70 = scmp.eq.s32.totalorder %s18, 1
      %p71 = scmp.ne.s32.totalorder %s66, %s68
      %p72 = scmp.eq.s32.totalorder %s18, 0
      %p73 = por %p71, %p72
      %p74 = scmp.ne.s32.totalorder %s66, %s68
      %p75 = scmp.eq.s32.totalorder %s23, 1
      %p76 = por %p74, %p75
      %p77 = scmp.ne.s32.totalorder %s68, %s69
      %p78 = scmp.eq.s32.totalorder %s23, 0
      %p79 = por %p77, %p78
      %p80 = scmp.ne.s32.totalorder %s68, %s69
      %p81 = scmp.eq.s32.totalorder %s24, 1
      %p82 = por %p80, %p81
      %p84 = scmp.ne.s32.totalorder %s69, %s83
      %p85 = scmp.eq.s32.totalorder %s24, 0
      %p86 = por %p84, %p85
      %s88 = sadd.s32 %s87, 1
      %p91 = scmp.eq.s32.totalorder %s18, 1
      %p92 = scmp.ne.s32.totalorder %s87, %s89
      %p93 = scmp.eq.s32.totalorder %s18, 0
      %p94 = por %p92, %p93
      %p95 = scmp.ne.s32.totalorder %s87, %s89
      %p96 = scmp.eq.s32.totalorder %s23, 1
      %p97 = por %p95, %p96
      %p98 = scmp.ne.s32.totalorder %s89, %s90
      %p99 = scmp.eq.s32.totalorder %s23, 0
      %p100 = por %p98, %p99
      %p101 = scmp.ne.s32.totalorder %s89, %s90
      %p102 = scmp.eq.s32.totalorder %s24, 1
      %p103 = por %p101, %p102
      %p105 = scmp.ne.s32.totalorder %s90, %s104
      %p106 = scmp.eq.s32.totalorder %s24, 0
      %p107 = por %p105, %p106
      %s109 = sadd.s32 %s108, 1
      %p112 = scmp.eq.s32.totalorder %s18, 1
      %p113 = scmp.ne.s32.totalorder %s108, %s110
      %p114 = scmp.eq.s32.totalorder %s18, 0
      %p115 = por %p113, %p114
      %p116 = scmp.ne.s32.totalorder %s108, %s110
      %p117 = scmp.eq.s32.totalorder %s23, 1
      %p118 = por %p116, %p117
      %p119 = scmp.ne.s32.totalorder %s110, %s111
      %p120 = scmp.eq.s32.totalorder %s23, 0
      %p121 = por %p119, %p120
      %p122 = scmp.ne.s32.totalorder %s110, %s111
      %p123 = scmp.eq.s32.totalorder %s24, 1
      %p124 = por %p122, %p123
      %p126 = scmp.ne.s32.totalorder %s111, %s125
      %p127 = scmp.eq.s32.totalorder %s24, 0
      %p128 = por %p126, %p127
      %s130 = sadd.s32 %s129, 1
      %p133 = scmp.eq.s32.totalorder %s18, 1
      %p134 = scmp.ne.s32.totalorder %s129, %s131
      %p135 = scmp.eq.s32.totalorder %s18, 0
      %p136 = por %p134, %p135
      %p137 = scmp.ne.s32.totalorder %s129, %s131
      %p138 = scmp.eq.s32.totalorder %s23, 1
      %p139 = por %p137, %p138
      %p140 = scmp.ne.s32.totalorder %s131, %s132
      %p141 = scmp.eq.s32.totalorder %s23, 0
      %p142 = por %p140, %p141
      %p143 = scmp.ne.s32.totalorder %s131, %s132
      %p144 = scmp.eq.s32.totalorder %s24, 1
      %p145 = por %p143, %p144
      %p147 = scmp.ne.s32.totalorder %s132, %s146
      %p148 = scmp.eq.s32.totalorder %s24, 0
      %p149 = por %p147, %p148
      %s151 = sadd.s32 %s150, 1
      %p154 = scmp.eq.s32.totalorder %s18, 1
      %p155 = scmp.ne.s32.totalorder %s150, %s152
      %p156 = scmp.eq.s32.totalorder %s18, 0
      %p157 = por %p155, %p156
      %p158 = scmp.ne.s32.totalorder %s150, %s152
      %p159 = scmp.eq.s32.totalorder %s23, 1
      %p160 = por %p158, %p159
      %p161 = scmp.ne.s32.totalorder %s152, %s153
      %p162 = scmp.eq.s32.totalorder %s23, 0
      %p163 = por %p161, %p162
      %p164 = scmp.ne.s32.totalorder %s152, %s153
      %p165 = scmp.eq.s32.totalorder %s24, 1
      %p166 = por %p164, %p165
      %p168 = scmp.ne.s32.totalorder %s153, %s167
      %p169 = scmp.eq.s32.totalorder %s24, 0
      %p170 = por %p168, %p169
      %s172 = sadd.s32 %s171, 1
      %p175 = scmp.eq.s32.totalorder %s18, 1
      %p176 = scmp.ne.s32.totalorder %s171, %s173
      %p177 = scmp.eq.s32.totalorder %s18, 0
      %p178 = por %p176, %p177
      %p179 = scmp.ne.s32.totalorder %s171, %s173
      %p180 = scmp.eq.s32.totalorder %s23, 1
      %p181 = por %p179, %p180
      %p182 = scmp.ne.s32.totalorder %s173, %s174
      %p183 = scmp.eq.s32.totalorder %s23, 0
      %p184 = por %p182, %p183
      %p185 = scmp.ne.s32.totalorder %s173, %s174
      %p186 = scmp.eq.s32.totalorder %s24, 1
      %p187 = por %p185, %p186
      %p189 = scmp.ne.s32.totalorder %s174, %s188
      %p190 = scmp.eq.s32.totalorder %s24, 0
      %p191 = por %p189, %p190
      %s192 = ssub.s32 %s25, %s37
      %s193 = ssub.s32 %s26, %s33
      %s194 = sor.u32 %s192, %s193
      %p195 = scmp.eq.s32.totalorder %s194, 0
      %s197 = sadd.s32 %s196, 1
      %s198 = scalar_select %p195, %s196, %s197
      %p201 = pneg %p195
      %p202 = scmp.eq.s32.totalorder %s18, 1
      %p203 = por %p201, %p202
      %p204 = scmp.ne.s32.totalorder %s196, %s199
      %p205 = scmp.eq.s32.totalorder %s18, 0
      %p206 = por %p204, %p205
      %p207 = scmp.ne.s32.totalorder %s196, %s199
      %p208 = scmp.eq.s32.totalorder %s23, 1
      %p209 = por %p207, %p208
      %p210 = scmp.ne.s32.totalorder %s199, %s200
      %p211 = scmp.eq.s32.totalorder %s23, 0
      %p212 = por %p210, %p211
      %p213 = scmp.ne.s32.totalorder %s199, %s200
      %p214 = scmp.eq.s32.totalorder %s24, 1
      %p215 = por %p213, %p214
      %p217 = scmp.ne.s32.totalorder %s200, %s216
      %p218 = scmp.eq.s32.totalorder %s24, 0
      %p219 = por %p217, %p218
      %p220 = scmp.le.s32.totalorder 1, %s18
      %p221 = scmp.lt.s32.totalorder %s18, 3
      %p222 = pnand %p220, %p221
      %p223 = pneg %p222
      // Predicated region
      $region9: #{tpu_custom_call.1} parent=5 // pred_check
        _
      $region10: #{tpu_custom_call.1} parent=5 // pred_check_branch
        %225 = sbr.rel (%p222) target = $region12
      $region11: #{tpu_custom_call.1} parent=5 // pred_region
        %s226 = ssub.s32 %s18, 1
        // Predicated region
        $region13: #{tpu_custom_call.1} parent=11 // pred_check
          %p227 = pneg %p79
        $region14: #{tpu_custom_call.1} parent=11 // pred_check_branch
          %229 = sbr.rel (%p227) target = $region16
        $region15: #{tpu_custom_call.1} parent=11 // pred_region
          _
        $region16: #{tpu_custom_call.1} parent=11 // pred_fallthru
          _
        // Predicated region
        $region17: #{tpu_custom_call.1} parent=11 // pred_check
          %p230 = pneg %p100
        $region18: #{tpu_custom_call.1} parent=11 // pred_check_branch
          %232 = sbr.rel (%p230) target = $region20
        $region19: #{tpu_custom_call.1} parent=11 // pred_region
          _
        $region20: #{tpu_custom_call.1} parent=11 // pred_fallthru
          _
        // Predicated region
        $region21: #{tpu_custom_call.1} parent=11 // pred_check
          %p233 = pneg %p121
        $region22: #{tpu_custom_call.1} parent=11 // pred_check_branch
          %235 = sbr.rel (%p233) target = $region24
        $region23: #{tpu_custom_call.1} parent=11 // pred_region
          _
        $region24: #{tpu_custom_call.1} parent=11 // pred_fallthru
          _
        // Predicated region
        $region25: #{tpu_custom_call.1} parent=11 // pred_check
          %p236 = pneg %p142
        $region26: #{tpu_custom_call.1} parent=11 // pred_check_branch
          %238 = sbr.rel (%p236) target = $region28
        $region27: #{tpu_custom_call.1} parent=11 // pred_region
          _
        $region28: #{tpu_custom_call.1} parent=11 // pred_fallthru
          _
        // Predicated region
        $region29: #{tpu_custom_call.1} parent=11 // pred_check
          %p239 = pneg %p163
        $region30: #{tpu_custom_call.1} parent=11 // pred_check_branch
          %241 = sbr.rel (%p239) target = $region32
        $region31: #{tpu_custom_call.1} parent=11 // pred_region
          _
        $region32: #{tpu_custom_call.1} parent=11 // pred_fallthru
          _
        // Predicated region
        $region33: #{tpu_custom_call.1} parent=11 // pred_check
          %p242 = pneg %p184
        $region34: #{tpu_custom_call.1} parent=11 // pred_check_branch
          %244 = sbr.rel (%p242) target = $region36
        $region35: #{tpu_custom_call.1} parent=11 // pred_region
          _
        $region36: #{tpu_custom_call.1} parent=11 // pred_fallthru
          _
      $region12: #{tpu_custom_call.1} parent=5 // pred_fallthru
        _
      %p245 = scmp.lt.s32.totalorder %s18, 2
      // Predicated region
      $region37: #{tpu_custom_call.1} parent=5 // pred_check
        %p246 = pneg %p245
      $region38: #{tpu_custom_call.1} parent=5 // pred_check_branch
        %248 = sbr.rel (%p246) target = $region40
      $region39: #{tpu_custom_call.1} parent=5 // pred_region
        // Predicated region
        $region41: #{tpu_custom_call.1} parent=39 // pred_check
          %p249 = pneg %p52
        $region42: #{tpu_custom_call.1} parent=39 // pred_check_branch
          %251 = sbr.rel (%p249) target = $region44
        $region43: #{tpu_custom_call.1} parent=39 // pred_region
          %p252 = scmp.lt.s32.totalorder %s25, 1
          %s253 = scalar_select %p252, %s25, 1
          %p254 = scmp.lt.s32.totalorder %s26, 0
          %s255 = scalar_select %p254, %s26, 0
          %s256 = sadd.s32 %s255, %s253
          %s257 = scalar_lea.vmem %s0, %s256
        $region44: #{tpu_custom_call.1} parent=39 // pred_fallthru
          _
      $region40: #{tpu_custom_call.1} parent=5 // pred_fallthru
        _
      %p258 = scmp.le.s32.totalorder 1, %s18
      %p259 = scmp.lt.s32.totalorder %s18, 3
      %p260 = pnand %p258, %p259
      %p261 = pneg %p260
      // Predicated region
      $region45: #{tpu_custom_call.1} parent=5 // pred_check
        _
      $region46: #{tpu_custom_call.1} parent=5 // pred_check_branch
        %263 = sbr.rel (%p260) target = $region48
      $region47: #{tpu_custom_call.1} parent=5 // pred_region
        %s264 = ssub.s32 %s18, 1
        %p265 = scmp.lt.s32.totalorder %s27, 1
        %s266 = scalar_select %p265, %s27, 1
        %p267 = scmp.lt.s32.totalorder %s28, 0
        %s268 = scalar_select %p267, %s28, 0
        %s269 = sadd.s32 %s268, %s266
        %s270 = scalar_lea.vmem %s0, %s269
        %p271 = pneg %p58
        %p272 = pneg %p55
        %p273 = pneg %p79
        %p274 = pneg %p76
        %p275 = pneg %p100
        %p276 = pneg %p97
        %p277 = pneg %p121
        %p278 = pneg %p118
        %p279 = pneg %p142
        %p280 = pneg %p139
        %p281 = pneg %p163
        %p282 = pneg %p160
        %p283 = pneg %p184
        %p284 = pneg %p181
        %p285 = pneg %p212
        %p286 = pneg %p209
        %s287 = sand.u32 %s199, 1
        %s288 = scalar_lea.sflag [#allocation4], %s287
        %s289 = sand.u32 %s199, 1
        %s290 = scalar_lea.vmem [#allocation3], %s289
        %p291 = scmp.lt.s32.totalorder %s27, 1
        %s292 = scalar_select %p291, %s27, 1
        %p293 = scmp.lt.s32.totalorder %s28, 0
        %s294 = scalar_select %p293, %s28, 0
        %s295 = sadd.s32 %s294, %s292
        %s296 = scalar_lea.vmem %s0, %s295
        %v297 = vld [vmem:[%s296] sm:$0x1]
        %v298 = vld [vmem:[%s1] sm:$0xff]
        %v299 = vld [vmem:[%s1 + $0x8] sm:$0xff]
        %v300 = vld [vmem:[%s1 + $0x10] sm:$0xff]
        %v301 = vld [vmem:[%s1 + $0x18] sm:$0xff]
        %v302 = vld [vmem:[%s4] sm:$0xff]
        %v303 = vld [vmem:[%s4 + $0x8] sm:$0xff]
        %v304 = vld [vmem:[%s4 + $0x10] sm:$0xff]
        %v305 = vld [vmem:[%s4 + $0x18] sm:$0xff]
        %307 = vset.pattern.permute.xlu0 0
        %308 = vperm.xlu0 %307, %v298
        %v309 = vpop.permute.xlu0 %308
        %312 = vset.pattern.permute.xlu0 0
        %313 = vperm.xlu0 %312, %v299
        %v314 = vpop.permute.xlu0 %313
        %317 = vset.pattern.permute.xlu0 0
        %318 = vperm.xlu0 %317, %v300
        %v319 = vpop.permute.xlu0 %318
        %322 = vset.pattern.permute.xlu0 0
        %323 = vperm.xlu0 %322, %v301
        %v324 = vpop.permute.xlu0 %323
        %v327 = vlaneseq
        %v328 = vshrl.u32 %v327, 7
        %v329 = vsub.s32 0, %v328
        %v330 = vrot.slane %v297, %v329
        %v332 = vmul.f32 %v309, %v330
        %v333 = vmul.f32 %v314, %v330
        %v334 = vmul.f32 %v319, %v330
        %v335 = vmul.f32 %v324, %v330
        %337 = vset.pattern.permute.xlu0 0
        %338 = vperm.xlu0 %337, %v302
        %v339 = vpop.permute.xlu0 %338
        %342 = vset.pattern.permute.xlu0 0
        %343 = vperm.xlu0 %342, %v303
        %v344 = vpop.permute.xlu0 %343
        %347 = vset.pattern.permute.xlu0 0
        %348 = vperm.xlu0 %347, %v304
        %v349 = vpop.permute.xlu0 %348
        %352 = vset.pattern.permute.xlu0 0
        %353 = vperm.xlu0 %352, %v305
        %v354 = vpop.permute.xlu0 %353
        %v356 = vadd.f32 %v332, %v339
        %v357 = vadd.f32 %v333, %v344
        %v358 = vadd.f32 %v334, %v349
        %v359 = vadd.f32 %v335, %v354
        %v360 = vmul.f32 %v356, 0.5
        %v361 = vmul.f32 %v357, 0.5
        %v362 = vmul.f32 %v358, 0.5
        %v363 = vmul.f32 %v359, 0.5
        %v364 = vtanh.pop %v360
        %v365 = vtanh.pop %v361
        %v366 = vtanh.pop %v362
        %v367 = vtanh.pop %v363
        %v368 = vmul.f32 %v364, 0.5
        %v369 = vmul.f32 %v365, 0.5
        %v370 = vmul.f32 %v366, 0.5
        %v371 = vmul.f32 %v367, 0.5
        %v372 = vadd.f32 %v368, 0.5
        %v373 = vadd.f32 %v369, 0.5
        %v374 = vadd.f32 %v370, 0.5
        %v375 = vadd.f32 %v371, 0.5
        %v376 = vld [vmem:[%s2] sm:$0xff]
        %v377 = vld [vmem:[%s2 + $0x8] sm:$0xff]
        %v378 = vld [vmem:[%s2 + $0x10] sm:$0xff]
        %v379 = vld [vmem:[%s2 + $0x18] sm:$0xff]
        %v380 = vld [vmem:[%s5] sm:$0xff]
        %v381 = vld [vmem:[%s5 + $0x8] sm:$0xff]
        %v382 = vld [vmem:[%s5 + $0x10] sm:$0xff]
        %v383 = vld [vmem:[%s5 + $0x18] sm:$0xff]
        %385 = vset.pattern.permute.xlu0 0
        %386 = vperm.xlu0 %385, %v380
        %v387 = vpop.permute.xlu0 %386
        %390 = vset.pattern.permute.xlu0 0
        %391 = vperm.xlu0 %390, %v381
        %v392 = vpop.permute.xlu0 %391
        %395 = vset.pattern.permute.xlu0 0
        %396 = vperm.xlu0 %395, %v382
        %v397 = vpop.permute.xlu0 %396
        %400 = vset.pattern.permute.xlu0 0
        %401 = vperm.xlu0 %400, %v383
        %v402 = vpop.permute.xlu0 %401
        %vm404 = vcmask 261120
        %v406 = vsel %vm404, %v376, 0
        %v409 = vsel %vm404, %v377, 0
        %v412 = vsel %vm404, %v378, 0
        %v415 = vsel %vm404, %v379, 0
        %417 = vmatprep.subr.mxu0 0.0
        %418 = vmatpush1.msra.mxu0 %v372
        %419 = vmatprep.subr.mxu0 0.0
        %420 = vmatpush1.msra.mxu0 %v373
        %421 = vmatprep.subr.mxu0 0.0
        %422 = vmatpush1.msra.mxu0 %v374
        %423 = vmatprep.subr.mxu0 0.0
        %424 = vmatpush1.msra.mxu0 %v375
        %425 = vmatprep.subr.mxu0 0.0
        %426 = vmatpush1.msra.mxu0 0.0
        %427 = vmatprep.subr.mxu0 0.0
        %428 = vmatpush1.msra.mxu0 0.0
        %429 = vmatprep.subr.mxu0 0.0
        %430 = vmatpush1.msra.mxu0 0.0
        %431 = vmatprep.subr.mxu0 0.0
        %432 = vmatpush1.msra.mxu0 0.0
        %433 = vmatprep.subr.mxu0 0.0
        %434 = vmatpush1.msra.mxu0 0.0
        %435 = vmatprep.subr.mxu0 0.0
        %436 = vmatpush1.msra.mxu0 0.0
        %437 = vmatprep.subr.mxu0 0.0
        %438 = vmatpush1.msra.mxu0 0.0
        %439 = vmatprep.subr.mxu0 0.0
        %440 = vmatpush1.msra.mxu0 0.0
        %441 = vmatprep.subr.mxu0 0.0
        %442 = vmatpush1.msra.mxu0 0.0
        %443 = vmatprep.subr.mxu0 0.0
        %444 = vmatpush1.msra.mxu0 0.0
        %445 = vmatprep.subr.mxu0 0.0
        %446 = vmatpush1.msra.mxu0 0.0
        %447 = vmatprep.subr.mxu0 0.0
        %448 = vmatpush1.msra.mxu0 0.0
        %449 = vmatprep.subr.mxu0 0.0
        %450 = vmatpush1.msra.mxu0 0.0
        %451 = vmatprep.subr.mxu0 0.0
        %452 = vmatpush1.msra.mxu0 0.0
        %453 = vmatprep.subr.mxu0 0.0
        %454 = vmatpush1.msra.mxu0 0.0
        %455 = vmatprep.subr.mxu0 0.0
        %456 = vmatpush1.msra.mxu0 0.0
        %457 = vmatprep.subr.mxu0 0.0
        %458 = vmatpush1.msra.mxu0 0.0
        %459 = vmatprep.subr.mxu0 0.0
        %460 = vmatpush1.msra.mxu0 0.0
        %461 = vmatprep.subr.mxu0 0.0
        %462 = vmatpush1.msra.mxu0 0.0
        %463 = vmatprep.subr.mxu0 0.0
        %464 = vmatpush1.msra.mxu0 0.0
        %465 = vmatprep.subr.mxu0 0.0
        %466 = vmatpush1.msra.mxu0 0.0
        %467 = vmatprep.subr.mxu0 0.0
        %468 = vmatpush1.msra.mxu0 0.0
        %469 = vmatprep.subr.mxu0 0.0
        %470 = vmatpush1.msra.mxu0 0.0
        %471 = vmatprep.subr.mxu0 0.0
        %472 = vmatpush1.msra.mxu0 0.0
        %473 = vmatprep.subr.mxu0 0.0
        %474 = vmatpush1.msra.mxu0 0.0
        %475 = vmatprep.subr.mxu0 0.0
        %476 = vmatpush1.msra.mxu0 0.0
        %477 = vmatprep.subr.mxu0 0.0
        %478 = vmatpush1.msra.mxu0 0.0
        %479 = vmatprep.subr.mxu0 0.0
        %480 = vmatpush1.msra.mxu0 0.0
        %481 = vmatprep.mubr.f32.mxu0 0.0
        %482 = vmatmul.mubr.f32.gmra.mrb[0].mxu0 %v406
        %v483 = vpop.f32.mrb[0].mxu0
        %v484 = vadd.f32 %v387, %v483
        %v485 = vpop.f32.mrb[0].mxu0
        %486 = vmatprep.mubr.f32.mxu0 0.0
        %487 = vmatmul.mubr.f32.gmra.mrb[0].mxu0 %v409
        %v488 = vpop.f32.mrb[0].mxu0
        %v489 = vadd.f32 %v392, %v488
        %v490 = vpop.f32.mrb[0].mxu0
        %491 = vmatprep.mubr.f32.mxu0 0.0
        %492 = vmatmul.mubr.f32.gmra.mrb[0].mxu0 %v412
        %v493 = vpop.f32.mrb[0].mxu0
        %v494 = vadd.f32 %v397, %v493
        %v495 = vpop.f32.mrb[0].mxu0
        %496 = vmatprep.mubr.f32.mxu0 0.0
        %497 = vmatmul.mubr.f32.gmra.mrb[0].mxu0 %v415
        %v498 = vpop.f32.mrb[0].mxu0
        %v499 = vadd.f32 %v402, %v498
        %v500 = vpop.f32.mrb[0].mxu0
        %501 = vdwg.mxu0
        %v502 = vmul.f32 %v484, 0.5
        %v503 = vmul.f32 %v489, 0.5
        %v504 = vmul.f32 %v494, 0.5
        %v505 = vmul.f32 %v499, 0.5
        %v506 = vtanh.pop %v502
        %v507 = vtanh.pop %v503
        %v508 = vtanh.pop %v504
        %v509 = vtanh.pop %v505
        %v510 = vmul.f32 %v506, 0.5
        %v511 = vmul.f32 %v507, 0.5
        %v512 = vmul.f32 %v508, 0.5
        %v513 = vmul.f32 %v509, 0.5
        %v514 = vadd.f32 %v510, 0.5
        %v515 = vadd.f32 %v511, 0.5
        %v516 = vadd.f32 %v512, 0.5
        %v517 = vadd.f32 %v513, 0.5
        %v518 = vld [vmem:[%s3] sm:$0x1]
        %v519 = vld [vmem:[#allocation2] sm:$0x1]
        %521 = vset.pattern.permute.xlu0 0
        %522 = vperm.xlu0 %521, %v519
        %v523 = vpop.permute.xlu0 %522
        %v525 = vlaneseq
        %v526 = vshrl.u32 %v525, 7
        %v527 = vsub.s32 0, %v526
        %v528 = vrot.slane %v523, %v527
        %v530 = vsel %vm404, %v518, 0
        %532 = vmatprep.subr.mxu0 0.0
        %533 = vmatpush1.msra.mxu0 %v514
        %534 = vmatprep.subr.mxu0 0.0
        %535 = vmatpush1.msra.mxu0 %v515
        %536 = vmatprep.subr.mxu0 0.0
        %537 = vmatpush1.msra.mxu0 %v516
        %538 = vmatprep.subr.mxu0 0.0
        %539 = vmatpush1.msra.mxu0 %v517
        %540 = vmatprep.subr.mxu0 0.0
        %541 = vmatpush1.msra.mxu0 0.0
        %542 = vmatprep.subr.mxu0 0.0
        %543 = vmatpush1.msra.mxu0 0.0
        %544 = vmatprep.subr.mxu0 0.0
        %545 = vmatpush1.msra.mxu0 0.0
        %546 = vmatprep.subr.mxu0 0.0
        %547 = vmatpush1.msra.mxu0 0.0
        %548 = vmatprep.subr.mxu0 0.0
        %549 = vmatpush1.msra.mxu0 0.0
        %550 = vmatprep.subr.mxu0 0.0
        %551 = vmatpush1.msra.mxu0 0.0
        %552 = vmatprep.subr.mxu0 0.0
        %553 = vmatpush1.msra.mxu0 0.0
        %554 = vmatprep.subr.mxu0 0.0
        %555 = vmatpush1.msra.mxu0 0.0
        %556 = vmatprep.subr.mxu0 0.0
        %557 = vmatpush1.msra.mxu0 0.0
        %558 = vmatprep.subr.mxu0 0.0
        %559 = vmatpush1.msra.mxu0 0.0
        %560 = vmatprep.subr.mxu0 0.0
        %561 = vmatpush1.msra.mxu0 0.0
        %562 = vmatprep.subr.mxu0 0.0
        %563 = vmatpush1.msra.mxu0 0.0
        %564 = vmatprep.subr.mxu0 0.0
        %565 = vmatpush1.msra.mxu0 0.0
        %566 = vmatprep.subr.mxu0 0.0
        %567 = vmatpush1.msra.mxu0 0.0
        %568 = vmatprep.subr.mxu0 0.0
        %569 = vmatpush1.msra.mxu0 0.0
        %570 = vmatprep.subr.mxu0 0.0
        %571 = vmatpush1.msra.mxu0 0.0
        %572 = vmatprep.subr.mxu0 0.0
        %573 = vmatpush1.msra.mxu0 0.0
        %574 = vmatprep.subr.mxu0 0.0
        %575 = vmatpush1.msra.mxu0 0.0
        %576 = vmatprep.subr.mxu0 0.0
        %577 = vmatpush1.msra.mxu0 0.0
        %578 = vmatprep.subr.mxu0 0.0
        %579 = vmatpush1.msra.mxu0 0.0
        %580 = vmatprep.subr.mxu0 0.0
        %581 = vmatpush1.msra.mxu0 0.0
        %582 = vmatprep.subr.mxu0 0.0
        %583 = vmatpush1.msra.mxu0 0.0
        %584 = vmatprep.subr.mxu0 0.0
        %585 = vmatpush1.msra.mxu0 0.0
        %586 = vmatprep.subr.mxu0 0.0
        %587 = vmatpush1.msra.mxu0 0.0
        %588 = vmatprep.subr.mxu0 0.0
        %589 = vmatpush1.msra.mxu0 0.0
        %590 = vmatprep.subr.mxu0 0.0
        %591 = vmatpush1.msra.mxu0 0.0
        %592 = vmatprep.subr.mxu0 0.0
        %593 = vmatpush1.msra.mxu0 0.0
        %594 = vmatprep.subr.mxu0 0.0
        %595 = vmatpush1.msra.mxu0 0.0
        %596 = vmatprep.mubr.f32.mxu0 0.0
        %597 = vmatmul.mubr.f32.gmra.mrb[0].mxu0 %v530
        %v598 = vpop.f32.mrb[0].mxu0
        %v599 = vadd.f32 %v528, %v598
        %v600 = vpop.f32.mrb[0].mxu0
        %601 = vdwg.mxu0
        %v602 = vand.u32 2147483647, %v599
        %vm603 = vcmask 122880
        %604 = vst.msk [vmem:[%s290] sm:$0x1] %vm603, %v602
        %s605 = sand.u32 %s199, 1
        %s606 = scalar_lea.sflag [#allocation4], %s605
        %s607 = sand.u32 %s199, 1
        %s608 = scalar_lea.vmem [#allocation3], %s607
        // Predicated region
        $region49: #{tpu_custom_call.1} parent=47 // pred_check
          %p609 = pneg %p209
        $region50: #{tpu_custom_call.1} parent=47 // pred_check_branch
          %611 = sbr.rel (%p609) target = $region52
        $region51: #{tpu_custom_call.1} parent=47 // pred_region
          %s613 = ssub.s32 16, 16
          %614 = vsyncadd %s606, %s613
          %s615 = sadd.s32 %s28, %s27
          %s616 = smul.addr %s615, 16
          %s617 = scalar_lea.hbm %s7, %s616
          %s619 = sshll.u32 %s608, 4
          %s620 = int_to_ptr.vmem [resolvable:$true] %s619
          %622 = dma.vmem_to_hbm [thread:$0]  %s620, 16, %s617, %s606
        $region52: #{tpu_custom_call.1} parent=47 // pred_fallthru
          _
      $region48: #{tpu_custom_call.1} parent=5 // pred_fallthru
        _
      %p623 = scmp.le.s32.totalorder 2, %s18
      // Predicated region
      $region53: #{tpu_custom_call.1} parent=5 // pred_check
        %p624 = pneg %p623
      $region54: #{tpu_custom_call.1} parent=5 // pred_check_branch
        %626 = sbr.rel (%p624) target = $region56
      $region55: #{tpu_custom_call.1} parent=5 // pred_region
        %s627 = ssub.s32 %s18, 2
        // Predicated region
        $region57: #{tpu_custom_call.1} parent=55 // pred_check
          %p628 = pneg %p215
        $region58: #{tpu_custom_call.1} parent=55 // pred_check_branch
          %630 = sbr.rel (%p628) target = $region60
        $region59: #{tpu_custom_call.1} parent=55 // pred_region
          %s631 = sand.u32 %s200, 1
          %s632 = scalar_lea.sflag [#allocation4], %s631
          %s633 = sand.u32 %s200, 1
          %s634 = scalar_lea.vmem [#allocation3], %s633
          %635 = dma.done %s632, 16
        $region60: #{tpu_custom_call.1} parent=55 // pred_fallthru
          _
      $region56: #{tpu_custom_call.1} parent=5 // pred_fallthru
        _
    $region6: #{tpu_custom_call.1} parent=1 // loop_footer
      %s22 = sadd.s32 1, %s18
    $region7: #{tpu_custom_call.1} parent=1 // loop_footer_branch
      %17 = sbr.rel target = $region3
    $region8: #{tpu_custom_call.1} parent=1 // loop_exit
      _
    %636 = vsyncpa [#allocation4], 1
    %s637 = scalar_lea.sflag [#allocation4], 1
    %638 = vsyncpa %s637, 1

</llo_original>
